<compile_context>
chip_gen: v5e
topology: v5e:2x2
jax: 0.10.0
libtpu: 0.0.40
codegen_flags: <defaults>
</compile_context>

<pallas_src>
import math

import numpy as np

import jax
import jax.numpy as jnp
from jax.experimental import pallas as pl
from jax.experimental.pallas import tpu as pltpu

# ----------------------------- model hyperparams -----------------------------
BATCH = 2
SEQ = 8             # time_steps (small test value)
D_MODEL = 16        # input_size, must be divisible by NUM_HEADS
NUM_HEADS = 4
HIDDEN = 32         # dim_feedforward (hidden_size, small test value)
FC1_OUT = 64
OUTPUT = 4
LN_EPS = 1e-5

assert D_MODEL % NUM_HEADS == 0, "input_size must be divisible by num_heads"
HEAD_DIM = D_MODEL // NUM_HEADS
BS = BATCH * SEQ
GROUPS = NUM_HEADS * BATCH          # attention batch = (head, batch) pairs
LANES = 128                         # lane width of the parameter slab / output
QKV_BLK = 16                        # per-head lane block in fused QKV: [q|k|v|pad]
FC2_PAD = 8                         # fc2 output lanes stored (OUTPUT padded to 8)

# ----------------------------- slab layout (lane-packed) ----------------------
# Weight region 0: rows [0:16]
R_W0 = 0
L_WQKV = 0          # (16, 64)  fused QKV, per-head 16-lane [q*scale | k | v | 0]
L_WFC1 = 64         # (16, 64)  fc1 weight, pre-transposed, / SEQ folded in
# Weight region 1: rows [16:32]
R_W1 = 16
L_WOUT = 0          # (16, 16)  attention out-proj, rows = (head, head_dim)
L_WFF1 = 16         # (16, 32)
L_WFF2 = 48         # (32, 16) stored as two 16-row strips: lanes 48:64, 64:80
L_WFC2 = 80         # (64, 8)  stored as four 16-row strips: lanes 80:88..104:112
# Bias / LayerNorm rows
R_BIAS0 = 32        # lanes 0:64 = b_qkv, 64:128 = b_fc1
R_BIAS1 = 33        # b_out | ln1_w | ln1_b | ln2_w | ln2_b | b_ff2 | b_ff1
L_BOUT, L_LN1W, L_LN1B, L_LN2W, L_LN2B, L_BFF2, L_BFF1 = 0, 16, 32, 48, 64, 80, 96
R_BIAS2 = 34        # lanes 0:8 = b_fc2 (zero-padded past OUTPUT)
SLAB_ROWS = 40      # padded to a multiple of 8; 40*128*4 B = 20 KiB total


def _layer_norm(x, w, b):
    # PyTorch nn.LayerNorm over last dim: biased variance, eps=1e-5.
    mu = jnp.mean(x, axis=-1, keepdims=True)
    xc = x - mu
    var = jnp.mean(xc * xc, axis=-1, keepdims=True)
    return xc * jax.lax.rsqrt(var + LN_EPS) * w + b


def transformer_kernel(x_ref, p_ref, o_ref):
    D, NH, Dh, H, F1 = D_MODEL, NUM_HEADS, HEAD_DIM, HIDDEN, FC1_OUT
    f32 = jnp.float32

    x = x_ref[...]                                                      # (B*S, D)

    # ---- fused QKV: one (BS,16)@(16,64) MXU pass (no per-head loop, no
    # broadcast of x).  1/sqrt(Dh) is pre-folded into the Q columns/bias. ----
    w_qkv = p_ref[R_W0:R_W0 + D, L_WQKV:L_WQKV + NH * QKV_BLK]          # (16, 64)
    b_qkv = p_ref[R_BIAS0:R_BIAS0 + 1, 0:NH * QKV_BLK]                  # (1, 64)
    qkv = jnp.dot(x, w_qkv, preferred_element_type=f32) + b_qkv         # (BS, 64)

    # Regroup to (G=(head,batch), S, 16): 4 static lane slices + row concat +
    # leading-dim reshape only (no transposes, no activation broadcast).
    grouped = jnp.concatenate(
        [qkv[:, h * QKV_BLK:(h + 1) * QKV_BLK] for h in range(NH)], axis=0
    ).reshape(GROUPS, SEQ, QKV_BLK)
    qg = grouped[..., 0:Dh]                                             # pre-scaled
    kg = grouped[..., Dh:2 * Dh]
    vg = grouped[..., 2 * Dh:3 * Dh]

    # ---- scaled dot-product attention, all (head, batch) groups at once ----
    s = jnp.einsum('gqd,gkd->gqk', qg, kg, preferred_element_type=f32)  # (G,S,S)
    s = s - jnp.max(s, axis=-1, keepdims=True)
    p = jnp.exp(s)
    p = p * pl.reciprocal(jnp.sum(p, axis=-1, keepdims=True), approx=True)
    ctx = jnp.einsum('gqk,gkd->gqd', p, vg, preferred_element_type=f32)  # (G,S,Dh)

    # ---- out-projection: per-head matmul, summed over heads (no concat) ----
    w_outh = p_ref[R_W1:R_W1 + NH * Dh, L_WOUT:L_WOUT + D].reshape(NH, Dh, D)
    b_out = p_ref[R_BIAS1:R_BIAS1 + 1, L_BOUT:L_BOUT + D]
    attn = jnp.einsum('hnd,hde->hne', ctx.reshape(NH, BS, Dh), w_outh,
                      preferred_element_type=f32)                       # (NH,BS,D)
    attn = jnp.sum(attn, axis=0) + b_out                                # (BS, D)

    # ---- residual + norm1 (post-norm encoder layer, dropout = identity) ----
    src = _layer_norm(x + attn,
                      p_ref[R_BIAS1:R_BIAS1 + 1, L_LN1W:L_LN1W + D],
                      p_ref[R_BIAS1:R_BIAS1 + 1, L_LN1B:L_LN1B + D])

    # ---- feed-forward: linear2(relu(linear1(src))) ----
    w_ff1 = p_ref[R_W1:R_W1 + D, L_WFF1:L_WFF1 + H]
    b_ff1 = p_ref[R_BIAS1:R_BIAS1 + 1, L_BFF1:L_BFF1 + H]
    hdn = jnp.maximum(jnp.dot(src, w_ff1, preferred_element_type=f32) + b_ff1, 0.0)
    # W_ff2 (32,16) re-stitched from its two 16-row strips.
    w_ff2 = jnp.concatenate(
        [p_ref[R_W1:R_W1 + 16, L_WFF2:L_WFF2 + 16],
         p_ref[R_W1:R_W1 + 16, L_WFF2 + 16:L_WFF2 + 32]], axis=0)       # (32, 16)
    b_ff2 = p_ref[R_BIAS1:R_BIAS1 + 1, L_BFF2:L_BFF2 + D]
    ff = jnp.dot(hdn, w_ff2, preferred_element_type=f32) + b_ff2

    # ---- residual + norm2 ----
    src = _layer_norm(src + ff,
                      p_ref[R_BIAS1:R_BIAS1 + 1, L_LN2W:L_LN2W + D],
                      p_ref[R_BIAS1:R_BIAS1 + 1, L_LN2B:L_LN2B + D])

    # ---- sequence pooling: 1/SEQ folded into W_fc1 host-side -> pure sum ----
    pooled = jnp.sum(src.reshape(BATCH, SEQ, D), axis=1)                # (B, D)
    pooled = jnp.concatenate(
        [pooled, jnp.zeros((8 - BATCH, D), f32)], axis=0)               # (8, D)

    # ---- fc1 + relu, fc2 ----
    w_fc1 = p_ref[R_W0:R_W0 + D, L_WFC1:L_WFC1 + F1]                    # (16, 64)
    b_fc1 = p_ref[R_BIAS0:R_BIAS0 + 1, L_WFC1:L_WFC1 + F1]
    h1 = jnp.maximum(jnp.dot(pooled, w_fc1, preferred_element_type=f32) + b_fc1,
                     0.0)                                               # (8, 64)
    # W_fc2 (64,8) re-stitched from its four 16-row strips.
    w_fc2 = jnp.concatenate(
        [p_ref[R_W1:R_W1 + 16, L_WFC2 + FC2_PAD * i:L_WFC2 + FC2_PAD * (i + 1)]
         for i in range(4)], axis=0)                                    # (64, 8)
    b_fc2 = p_ref[R_BIAS2:R_BIAS2 + 1, 0:FC2_PAD]
    out8 = jnp.dot(h1, w_fc2, preferred_element_type=f32) + b_fc2       # (8, 8)

    # Lane-pad to a full (8, 128) tile -> unmasked full-tile store.
    o_ref[...] = jnp.concatenate(
        [out8, jnp.zeros((8, LANES - FC2_PAD), f32)], axis=1).astype(o_ref.dtype)


def transformer_forward(x, slab):
    """x: (B, S, D) f32; slab: packed (SLAB_ROWS, 128) f32 params. -> (B, OUTPUT)."""
    assert x.shape == (BATCH, SEQ, D_MODEL), x.shape
    x2d = x.reshape(BATCH * SEQ, D_MODEL)
    out_pad = pl.pallas_call(
        transformer_kernel,
        out_shape=jax.ShapeDtypeStruct((8, LANES), jnp.float32),
        in_specs=[pl.BlockSpec(memory_space=pltpu.MemorySpace.VMEM),
                  pl.BlockSpec(memory_space=pltpu.MemorySpace.VMEM)],
        out_specs=pl.BlockSpec(memory_space=pltpu.MemorySpace.VMEM),
        # Gridless: whole problem is a few KB of VMEM.  At production sizes add a
        # "parallel" batch grid axis (v7x 2 TCs) and re-tile for v7x's 64 MiB VMEM.
        compiler_params=pltpu.CompilerParams(vmem_limit_bytes=2 << 20),
        cost_estimate=pl.CostEstimate(flops=110_000, transcendentals=700,
                                      bytes_accessed=26_000),
    )(x2d, slab)
    return out_pad[:BATCH, :OUTPUT]


# ----------------------------- host-side packing ------------------------------
def pack_params(params):
    """Pre-transpose weights to (in,out), fold the attention scale into Q and the
    1/SEQ pooling scale into W_fc1, and lane-pack everything into one
    (SLAB_ROWS, 128) f32 slab."""
    D, H, F1, O, NH, Dh = D_MODEL, HIDDEN, FC1_OUT, OUTPUT, NUM_HEADS, HEAD_DIM
    scale = 1.0 / math.sqrt(Dh)

    in_w = np.asarray(params['in_w'], np.float32)                 # (3D, D) torch (out,in)
    in_b = np.asarray(params['in_b'], np.float32).reshape(3 * D)

    # Fused QKV weight (in=D, NH*16) with per-head [q*scale | k | v | 0] blocks.
    wq = (in_w[0:D].T * scale).reshape(D, NH, Dh)
    wk = in_w[D:2 * D].T.reshape(D, NH, Dh)
    wv = in_w[2 * D:3 * D].T.reshape(D, NH, Dh)
    w_qkv = np.zeros((D, NH, QKV_BLK), np.float32)
    w_qkv[:, :, 0:Dh] = wq
    w_qkv[:, :, Dh:2 * Dh] = wk
    w_qkv[:, :, 2 * Dh:3 * Dh] = wv
    w_qkv = w_qkv.reshape(D, NH * QKV_BLK)

    b_qkv = np.zeros((NH, QKV_BLK), np.float32)
    b_qkv[:, 0:Dh] = (in_b[0:D] * scale).reshape(NH, Dh)
    b_qkv[:, Dh:2 * Dh] = in_b[D:2 * D].reshape(NH, Dh)
    b_qkv[:, 2 * Dh:3 * Dh] = in_b[2 * D:3 * D].reshape(NH, Dh)
    b_qkv = b_qkv.reshape(NH * QKV_BLK)

    w_out = np.asarray(params['out_w'], np.float32).T             # (in=(h,d), out=D)
    w_ff1 = np.asarray(params['ff1_w'], np.float32).T             # (D, H)
    w_ff2 = np.asarray(params['ff2_w'], np.float32).T             # (H, D)
    w_fc1 = np.asarray(params['fc1_w'], np.float32).T / SEQ       # mean-pool fold
    w_fc2 = np.zeros((F1, FC2_PAD), np.float32)
    w_fc2[:, 0:O] = np.asarray(params['fc2_w'], np.float32).T

    slab = np.zeros((SLAB_ROWS, LANES), np.float32)
    slab[R_W0:R_W0 + D, L_WQKV:L_WQKV + NH * QKV_BLK] = w_qkv
    slab[R_W0:R_W0 + D, L_WFC1:L_WFC1 + F1] = w_fc1
    slab[R_W1:R_W1 + D, L_WOUT:L_WOUT + D] = w_out
    slab[R_W1:R_W1 + D, L_WFF1:L_WFF1 + H] = w_ff1
    slab[R_W1:R_W1 + 16, L_WFF2:L_WFF2 + 16] = w_ff2[0:16]
    slab[R_W1:R_W1 + 16, L_WFF2 + 16:L_WFF2 + 32] = w_ff2[16:32]
    for i in range(4):
        slab[R_W1:R_W1 + 16,
             L_WFC2 + FC2_PAD * i:L_WFC2 + FC2_PAD * (i + 1)] = w_fc2[16 * i:16 * (i + 1)]

    slab[R_BIAS0, 0:NH * QKV_BLK] = b_qkv
    slab[R_BIAS0, L_WFC1:L_WFC1 + F1] = np.asarray(params['fc1_b'], np.float32).reshape(F1)
    slab[R_BIAS1, L_BOUT:L_BOUT + D] = np.asarray(params['out_b'], np.float32).reshape(D)
    slab[R_BIAS1, L_LN1W:L_LN1W + D] = np.asarray(params['ln1_w'], np.float32).reshape(D)
    slab[R_BIAS1, L_LN1B:L_LN1B + D] = np.asarray(params['ln1_b'], np.float32).reshape(D)
    slab[R_BIAS1, L_LN2W:L_LN2W + D] = np.asarray(params['ln2_w'], np.float32).reshape(D)
    slab[R_BIAS1, L_LN2B:L_LN2B + D] = np.asarray(params['ln2_b'], np.float32).reshape(D)
    slab[R_BIAS1, L_BFF2:L_BFF2 + D] = np.asarray(params['ff2_b'], np.float32).reshape(D)
    slab[R_BIAS1, L_BFF1:L_BFF1 + H] = np.asarray(params['ff1_b'], np.float32).reshape(H)
    slab[R_BIAS2, 0:O] = np.asarray(params['fc2_b'], np.float32).reshape(O)
    return jnp.asarray(slab)


def init_params(key):
    """Deterministic synthetic parameters matching the torch module shapes."""
    ks = jax.random.split(key, 16)
    D, H, F1, O = D_MODEL, HIDDEN, FC1_OUT, OUTPUT

    def nrm(k, shape, scale=0.05):
        return (scale * jax.random.normal(k, shape)).astype(jnp.float32)

    return {
        'in_w': nrm(ks[0], (3 * D, D)),
        'in_b': nrm(ks[1], (1, 3 * D)),
        'out_w': nrm(ks[2], (D, D)),
        'out_b': nrm(ks[3], (1, D)),
        'ln1_w': jnp.ones((1, D), jnp.float32),
        'ln1_b': jnp.zeros((1, D), jnp.float32),
        'ln2_w': jnp.ones((1, D), jnp.float32),
        'ln2_b': jnp.zeros((1, D), jnp.float32),
        'ff1_w': nrm(ks[4], (H, D)),
        'ff1_b': nrm(ks[5], (1, H)),
        'ff2_w': nrm(ks[6], (D, H)),
        'ff2_b': nrm(ks[7], (1, D)),
        'fc1_w': nrm(ks[8], (F1, D)),
        'fc1_b': nrm(ks[9], (1, F1)),
        'fc2_w': nrm(ks[10], (O, F1)),
        'fc2_b': nrm(ks[11], (1, O)),
    }


def reference_forward(x, params):
    """Pure-JAX reference with the original torch-layout params (inference mode)."""
    D = D_MODEL
    Dh = HEAD_DIM
    scale = 1.0 / math.sqrt(Dh)
    hi_p = jax.lax.Precision.HIGHEST
    in_w, in_b = params['in_w'], params['in_b']
    q = jnp.einsum('bsd,ed->bse', x, in_w[0:D], precision=hi_p) + in_b[:, 0:D]
    k = jnp.einsum('bsd,ed->bse', x, in_w[D:2 * D], precision=hi_p) + in_b[:, D:2 * D]
    v = jnp.einsum('bsd,ed->bse', x, in_w[2 * D:], precision=hi_p) + in_b[:, 2 * D:]
    heads = []
    for h in range(NUM_HEADS):
        lo, hi = h * Dh, (h + 1) * Dh
        s = jnp.einsum('bqd,bkd->bqk', q[..., lo:hi], k[..., lo:hi], precision=hi_p) * scale
        p = jax.nn.softmax(s, axis=-1)
        heads.append(jnp.einsum('bqk,bkd->bqd', p, v[..., lo:hi], precision=hi_p))
    attn = jnp.concatenate(heads, axis=-1)
    attn = jnp.einsum('bsd,ed->bse', attn, params['out_w'], precision=hi_p) + params['out_b']

    def ln(z, w, b):
        mu = z.mean(-1, keepdims=True)
        zc = z - mu
        var = (zc * zc).mean(-1, keepdims=True)
        return zc * jax.lax.rsqrt(var + LN_EPS) * w + b

    src = ln(x + attn, params['ln1_w'], params['ln1_b'])
    hdn = jnp.maximum(jnp.einsum('bsd,hd->bsh', src, params['ff1_w'], precision=hi_p)
                      + params['ff1_b'], 0.0)
    ff = jnp.einsum('bsh,dh->bsd', hdn, params['ff2_w'], precision=hi_p) + params['ff2_b']
    src = ln(src + ff, params['ln2_w'], params['ln2_b'])
    pooled = src.mean(axis=1)
    h1 = jnp.maximum(jnp.dot(pooled, params['fc1_w'].T, precision=hi_p) + params['fc1_b'], 0.0)
    return jnp.dot(h1, params['fc2_w'].T, precision=hi_p) + params['fc2_b']


if __name__ == "__main__":
    key = jax.random.PRNGKey(0)
    kx, kp = jax.random.split(key)
    x = jax.random.normal(kx, (BATCH, SEQ, D_MODEL), dtype=jnp.float32)
    params = init_params(kp)
    slab = pack_params(params)

    out = transformer_forward(x, slab)
    out = jax.block_until_ready(out)
    assert out.shape == (BATCH, OUTPUT), out.shape
    assert bool(jnp.all(jnp.isfinite(out)))

    ref = reference_forward(x, params)
    assert jnp.allclose(out, ref, rtol=1e-2, atol=2e-3), float(jnp.max(jnp.abs(out - ref)))
    print("KERNEL_OK")
</pallas_src>

<mosaic_0001>
module attributes {stable_mosaic.version = 11 : i64} {
  func.func @transformer_kernel(%arg0: memref<16x16xf32, #tpu.memory_space<vmem>>, %arg1: memref<40x128xf32, #tpu.memory_space<vmem>>, %arg2: memref<8x128xf32, #tpu.memory_space<vmem>>) attributes {dimension_semantics = [], scalar_prefetch = 0 : i64, scratch_operands = 0 : i64, tpu.core_type = #tpu.core_type<tc>} {
    %c0 = arith.constant 0 : index
    %c0_0 = arith.constant 0 : index
    %0 = vector.load %arg0[%c0, %c0_0] : memref<16x16xf32, #tpu.memory_space<vmem>>, vector<16x16xf32>
    %c0_1 = arith.constant 0 : index
    %c0_2 = arith.constant 0 : index
    %1 = vector.load %arg1[%c0_1, %c0_2] : memref<40x128xf32, #tpu.memory_space<vmem>>, vector<16x64xf32>
    %c32 = arith.constant 32 : index
    %c0_3 = arith.constant 0 : index
    %2 = vector.load %arg1[%c32, %c0_3] : memref<40x128xf32, #tpu.memory_space<vmem>>, vector<1x64xf32>
    %cst = arith.constant dense<0.000000e+00> : vector<16x64xf32>
    %3 = tpu.matmul %0, %1, %cst {dimension_numbers = #tpu.dot_dimension_numbers<[1], [0], [0], [1], [0, 0, 1, 1], [], []>} : vector<16x16xf32>, vector<16x64xf32>, vector<16x64xf32> -> vector<16x64xf32>
    %4 = vector.broadcast %2 : vector<1x64xf32> to vector<16x64xf32>
    %5 = arith.addf %3, %4 : vector<16x64xf32>
    %6 = vector.extract_strided_slice %5 {offsets = [0, 0], sizes = [16, 16], strides = [1, 1]} : vector<16x64xf32> to vector<16x16xf32>
    %7 = vector.extract_strided_slice %5 {offsets = [0, 16], sizes = [16, 16], strides = [1, 1]} : vector<16x64xf32> to vector<16x16xf32>
    %8 = vector.extract_strided_slice %5 {offsets = [0, 32], sizes = [16, 16], strides = [1, 1]} : vector<16x64xf32> to vector<16x16xf32>
    %9 = vector.extract_strided_slice %5 {offsets = [0, 48], sizes = [16, 16], strides = [1, 1]} : vector<16x64xf32> to vector<16x16xf32>
    %10 = tpu.concatenate %6, %7, %8, %9 in 0 : vector<16x16xf32>, vector<16x16xf32>, vector<16x16xf32>, vector<16x16xf32> -> vector<64x16xf32>
    %11 = vector.shape_cast %10 : vector<64x16xf32> to vector<8x8x16xf32>
    %12 = vector.extract_strided_slice %11 {offsets = [0, 0, 0], sizes = [8, 8, 4], strides = [1, 1, 1]} : vector<8x8x16xf32> to vector<8x8x4xf32>
    %13 = vector.extract_strided_slice %11 {offsets = [0, 0, 4], sizes = [8, 8, 4], strides = [1, 1, 1]} : vector<8x8x16xf32> to vector<8x8x4xf32>
    %14 = vector.extract_strided_slice %11 {offsets = [0, 0, 8], sizes = [8, 8, 4], strides = [1, 1, 1]} : vector<8x8x16xf32> to vector<8x8x4xf32>
    "tpu.trace_start"() <{level = 10 : i32, message = "gqd,gkd->gqk"}> : () -> ()
    %cst_4 = arith.constant dense<0.000000e+00> : vector<8x8x8xf32>
    %15 = tpu.matmul %12, %13, %cst_4 {dimension_numbers = #tpu.dot_dimension_numbers<[2], [2], [1], [1], [0, 0, 0, 1, 1, 1], [0], [0]>} : vector<8x8x4xf32>, vector<8x8x4xf32>, vector<8x8x8xf32> -> vector<8x8x8xf32>
    "tpu.trace_stop"() : () -> ()
    %cst_5 = arith.constant dense<0xFF800000> : vector<8x8xf32>
    %16 = vector.multi_reduction <maximumf>, %15, %cst_5 [2] : vector<8x8x8xf32> to vector<8x8xf32>
    %17 = vector.shape_cast %16 : vector<8x8xf32> to vector<8x8x1xf32>
    %18 = vector.broadcast %17 : vector<8x8x1xf32> to vector<8x8x8xf32>
    %19 = arith.subf %15, %18 : vector<8x8x8xf32>
    %20 = math.exp %19 : vector<8x8x8xf32>
    %cst_6 = arith.constant dense<0.000000e+00> : vector<8x8xf32>
    %21 = vector.multi_reduction <add>, %20, %cst_6 [2] : vector<8x8x8xf32> to vector<8x8xf32>
    %22 = vector.shape_cast %21 : vector<8x8xf32> to vector<8x8x1xf32>
    %23 = tpu.reciprocal %22 {approx = true} : vector<8x8x1xf32> -> vector<8x8x1xf32>
    %24 = vector.broadcast %23 : vector<8x8x1xf32> to vector<8x8x8xf32>
    %25 = arith.mulf %20, %24 : vector<8x8x8xf32>
    "tpu.trace_start"() <{level = 10 : i32, message = "gqk,gkd->gqd"}> : () -> ()
    %cst_7 = arith.constant dense<0.000000e+00> : vector<8x8x4xf32>
    %26 = tpu.matmul %25, %14, %cst_7 {dimension_numbers = #tpu.dot_dimension_numbers<[2], [1], [1], [2], [0, 0, 0, 1, 1, 2], [0], [0]>} : vector<8x8x8xf32>, vector<8x8x4xf32>, vector<8x8x4xf32> -> vector<8x8x4xf32>
    "tpu.trace_stop"() : () -> ()
    %c16 = arith.constant 16 : index
    %c0_8 = arith.constant 0 : index
    %27 = vector.load %arg1[%c16, %c0_8] : memref<40x128xf32, #tpu.memory_space<vmem>>, vector<16x16xf32>
    %28 = vector.shape_cast %27 : vector<16x16xf32> to vector<4x4x16xf32>
    %c33 = arith.constant 33 : index
    %c0_9 = arith.constant 0 : index
    %29 = vector.load %arg1[%c33, %c0_9] : memref<40x128xf32, #tpu.memory_space<vmem>>, vector<1x16xf32>
    %30 = vector.shape_cast %26 : vector<8x8x4xf32> to vector<4x16x4xf32>
    "tpu.trace_start"() <{level = 10 : i32, message = "hnd,hde->hne"}> : () -> ()
    %cst_10 = arith.constant dense<0.000000e+00> : vector<4x16x16xf32>
    %31 = tpu.matmul %30, %28, %cst_10 {dimension_numbers = #tpu.dot_dimension_numbers<[2], [1], [1], [2], [0, 0, 0, 1, 1, 2], [0], [0]>} : vector<4x16x4xf32>, vector<4x4x16xf32>, vector<4x16x16xf32> -> vector<4x16x16xf32>
    "tpu.trace_stop"() : () -> ()
    %cst_11 = arith.constant dense<0.000000e+00> : vector<16x16xf32>
    %32 = vector.multi_reduction <add>, %31, %cst_11 [0] : vector<4x16x16xf32> to vector<16x16xf32>
    %33 = vector.broadcast %29 : vector<1x16xf32> to vector<16x16xf32>
    %34 = arith.addf %32, %33 : vector<16x16xf32>
    %35 = arith.addf %0, %34 : vector<16x16xf32>
    %c33_12 = arith.constant 33 : index
    %c16_13 = arith.constant 16 : index
    %36 = vector.load %arg1[%c33_12, %c16_13] : memref<40x128xf32, #tpu.memory_space<vmem>>, vector<1x16xf32>
    %c33_14 = arith.constant 33 : index
    %c32_15 = arith.constant 32 : index
    %37 = vector.load %arg1[%c33_14, %c32_15] : memref<40x128xf32, #tpu.memory_space<vmem>>, vector<1x16xf32>
    %cst_16 = arith.constant dense<0.000000e+00> : vector<16xf32>
    %38 = vector.multi_reduction <add>, %35, %cst_16 [1] : vector<16x16xf32> to vector<16xf32>
    %39 = vector.shape_cast %38 : vector<16xf32> to vector<16x1xf32>
    %cst_17 = arith.constant 1.600000e+01 : f32
    %40 = vector.broadcast %cst_17 : f32 to vector<16x1xf32>
    %41 = arith.divf %39, %40 : vector<16x1xf32>
    %42 = vector.broadcast %41 : vector<16x1xf32> to vector<16x16xf32>
    %43 = arith.subf %35, %42 : vector<16x16xf32>
    %44 = arith.mulf %43, %43 : vector<16x16xf32>
    %cst_18 = arith.constant dense<0.000000e+00> : vector<16xf32>
    %45 = vector.multi_reduction <add>, %44, %cst_18 [1] : vector<16x16xf32> to vector<16xf32>
    %46 = vector.shape_cast %45 : vector<16xf32> to vector<16x1xf32>
    %cst_19 = arith.constant 1.600000e+01 : f32
    %47 = vector.broadcast %cst_19 : f32 to vector<16x1xf32>
    %48 = arith.divf %46, %47 : vector<16x1xf32>
    %cst_20 = arith.constant 9.99999974E-6 : f32
    %49 = vector.broadcast %cst_20 : f32 to vector<16x1xf32>
    %50 = arith.addf %48, %49 : vector<16x1xf32>
    %51 = math.rsqrt %50 : vector<16x1xf32>
    %52 = vector.broadcast %51 : vector<16x1xf32> to vector<16x16xf32>
    %53 = arith.mulf %43, %52 : vector<16x16xf32>
    %54 = vector.broadcast %36 : vector<1x16xf32> to vector<16x16xf32>
    %55 = arith.mulf %53, %54 : vector<16x16xf32>
    %56 = vector.broadcast %37 : vector<1x16xf32> to vector<16x16xf32>
    %57 = arith.addf %55, %56 : vector<16x16xf32>
    %c16_21 = arith.constant 16 : index
    %c16_22 = arith.constant 16 : index
    %58 = vector.load %arg1[%c16_21, %c16_22] : memref<40x128xf32, #tpu.memory_space<vmem>>, vector<16x32xf32>
    %c33_23 = arith.constant 33 : index
    %c96 = arith.constant 96 : index
    %59 = vector.load %arg1[%c33_23, %c96] : memref<40x128xf32, #tpu.memory_space<vmem>>, vector<1x32xf32>
    %cst_24 = arith.constant dense<0.000000e+00> : vector<16x32xf32>
    %60 = tpu.matmul %57, %58, %cst_24 {dimension_numbers = #tpu.dot_dimension_numbers<[1], [0], [0], [1], [0, 0, 1, 1], [], []>} : vector<16x16xf32>, vector<16x32xf32>, vector<16x32xf32> -> vector<16x32xf32>
    %61 = vector.broadcast %59 : vector<1x32xf32> to vector<16x32xf32>
    %62 = arith.addf %60, %61 : vector<16x32xf32>
    %cst_25 = arith.constant 0.000000e+00 : f32
    %63 = vector.broadcast %cst_25 : f32 to vector<16x32xf32>
    %64 = arith.maximumf %62, %63 : vector<16x32xf32>
    %c16_26 = arith.constant 16 : index
    %c48 = arith.constant 48 : index
    %65 = vector.load %arg1[%c16_26, %c48] : memref<40x128xf32, #tpu.memory_space<vmem>>, vector<16x16xf32>
    %c16_27 = arith.constant 16 : index
    %c64 = arith.constant 64 : index
    %66 = vector.load %arg1[%c16_27, %c64] : memref<40x128xf32, #tpu.memory_space<vmem>>, vector<16x16xf32>
    %67 = tpu.concatenate %65, %66 in 0 : vector<16x16xf32>, vector<16x16xf32> -> vector<32x16xf32>
    %c33_28 = arith.constant 33 : index
    %c80 = arith.constant 80 : index
    %68 = vector.load %arg1[%c33_28, %c80] : memref<40x128xf32, #tpu.memory_space<vmem>>, vector<1x16xf32>
    %cst_29 = arith.constant dense<0.000000e+00> : vector<16x16xf32>
    %69 = tpu.matmul %64, %67, %cst_29 {dimension_numbers = #tpu.dot_dimension_numbers<[1], [0], [0], [1], [0, 0, 1, 1], [], []>} : vector<16x32xf32>, vector<32x16xf32>, vector<16x16xf32> -> vector<16x16xf32>
    %70 = vector.broadcast %68 : vector<1x16xf32> to vector<16x16xf32>
    %71 = arith.addf %69, %70 : vector<16x16xf32>
    %72 = arith.addf %57, %71 : vector<16x16xf32>
    %c33_30 = arith.constant 33 : index
    %c48_31 = arith.constant 48 : index
    %73 = vector.load %arg1[%c33_30, %c48_31] : memref<40x128xf32, #tpu.memory_space<vmem>>, vector<1x16xf32>
    %c33_32 = arith.constant 33 : index
    %c64_33 = arith.constant 64 : index
    %74 = vector.load %arg1[%c33_32, %c64_33] : memref<40x128xf32, #tpu.memory_space<vmem>>, vector<1x16xf32>
    %cst_34 = arith.constant dense<0.000000e+00> : vector<16xf32>
    %75 = vector.multi_reduction <add>, %72, %cst_34 [1] : vector<16x16xf32> to vector<16xf32>
    %76 = vector.shape_cast %75 : vector<16xf32> to vector<16x1xf32>
    %cst_35 = arith.constant 1.600000e+01 : f32
    %77 = vector.broadcast %cst_35 : f32 to vector<16x1xf32>
    %78 = arith.divf %76, %77 : vector<16x1xf32>
    %79 = vector.broadcast %78 : vector<16x1xf32> to vector<16x16xf32>
    %80 = arith.subf %72, %79 : vector<16x16xf32>
    %81 = arith.mulf %80, %80 : vector<16x16xf32>
    %cst_36 = arith.constant dense<0.000000e+00> : vector<16xf32>
    %82 = vector.multi_reduction <add>, %81, %cst_36 [1] : vector<16x16xf32> to vector<16xf32>
    %83 = vector.shape_cast %82 : vector<16xf32> to vector<16x1xf32>
    %cst_37 = arith.constant 1.600000e+01 : f32
    %84 = vector.broadcast %cst_37 : f32 to vector<16x1xf32>
    %85 = arith.divf %83, %84 : vector<16x1xf32>
    %cst_38 = arith.constant 9.99999974E-6 : f32
    %86 = vector.broadcast %cst_38 : f32 to vector<16x1xf32>
    %87 = arith.addf %85, %86 : vector<16x1xf32>
    %88 = math.rsqrt %87 : vector<16x1xf32>
    %89 = vector.broadcast %88 : vector<16x1xf32> to vector<16x16xf32>
    %90 = arith.mulf %80, %89 : vector<16x16xf32>
    %91 = vector.broadcast %73 : vector<1x16xf32> to vector<16x16xf32>
    %92 = arith.mulf %90, %91 : vector<16x16xf32>
    %93 = vector.broadcast %74 : vector<1x16xf32> to vector<16x16xf32>
    %94 = arith.addf %92, %93 : vector<16x16xf32>
    %95 = vector.shape_cast %94 : vector<16x16xf32> to vector<2x8x16xf32>
    %cst_39 = arith.constant dense<0.000000e+00> : vector<2x16xf32>
    %96 = vector.multi_reduction <add>, %95, %cst_39 [1] : vector<2x8x16xf32> to vector<2x16xf32>
    %cst_40 = arith.constant 0.000000e+00 : f32
    %97 = vector.broadcast %cst_40 : f32 to vector<6x16xf32>
    %98 = tpu.concatenate %96, %97 in 0 : vector<2x16xf32>, vector<6x16xf32> -> vector<8x16xf32>
    %c0_41 = arith.constant 0 : index
    %c64_42 = arith.constant 64 : index
    %99 = vector.load %arg1[%c0_41, %c64_42] : memref<40x128xf32, #tpu.memory_space<vmem>>, vector<16x64xf32>
    %c32_43 = arith.constant 32 : index
    %c64_44 = arith.constant 64 : index
    %100 = vector.load %arg1[%c32_43, %c64_44] : memref<40x128xf32, #tpu.memory_space<vmem>>, vector<1x64xf32>
    %cst_45 = arith.constant dense<0.000000e+00> : vector<8x64xf32>
    %101 = tpu.matmul %98, %99, %cst_45 {dimension_numbers = #tpu.dot_dimension_numbers<[1], [0], [0], [1], [0, 0, 1, 1], [], []>} : vector<8x16xf32>, vector<16x64xf32>, vector<8x64xf32> -> vector<8x64xf32>
    %102 = vector.broadcast %100 : vector<1x64xf32> to vector<8x64xf32>
    %103 = arith.addf %101, %102 : vector<8x64xf32>
    %cst_46 = arith.constant 0.000000e+00 : f32
    %104 = vector.broadcast %cst_46 : f32 to vector<8x64xf32>
    %105 = arith.maximumf %103, %104 : vector<8x64xf32>
    %c16_47 = arith.constant 16 : index
    %c80_48 = arith.constant 80 : index
    %106 = vector.load %arg1[%c16_47, %c80_48] : memref<40x128xf32, #tpu.memory_space<vmem>>, vector<16x8xf32>
    %c16_49 = arith.constant 16 : index
    %c88 = arith.constant 88 : index
    %107 = vector.load %arg1[%c16_49, %c88] : memref<40x128xf32, #tpu.memory_space<vmem>>, vector<16x8xf32>
    %c16_50 = arith.constant 16 : index
    %c96_51 = arith.constant 96 : index
    %108 = vector.load %arg1[%c16_50, %c96_51] : memref<40x128xf32, #tpu.memory_space<vmem>>, vector<16x8xf32>
    %c16_52 = arith.constant 16 : index
    %c104 = arith.constant 104 : index
    %109 = vector.load %arg1[%c16_52, %c104] : memref<40x128xf32, #tpu.memory_space<vmem>>, vector<16x8xf32>
    %110 = tpu.concatenate %106, %107, %108, %109 in 0 : vector<16x8xf32>, vector<16x8xf32>, vector<16x8xf32>, vector<16x8xf32> -> vector<64x8xf32>
    %c34 = arith.constant 34 : index
    %c0_53 = arith.constant 0 : index
    %111 = vector.load %arg1[%c34, %c0_53] : memref<40x128xf32, #tpu.memory_space<vmem>>, vector<1x8xf32>
    %cst_54 = arith.constant dense<0.000000e+00> : vector<8x8xf32>
    %112 = tpu.matmul %105, %110, %cst_54 {dimension_numbers = #tpu.dot_dimension_numbers<[1], [0], [0], [1], [0, 0, 1, 1], [], []>} : vector<8x64xf32>, vector<64x8xf32>, vector<8x8xf32> -> vector<8x8xf32>
    %113 = vector.broadcast %111 : vector<1x8xf32> to vector<8x8xf32>
    %114 = arith.addf %112, %113 : vector<8x8xf32>
    %cst_55 = arith.constant 0.000000e+00 : f32
    %115 = vector.broadcast %cst_55 : f32 to vector<8x120xf32>
    %116 = tpu.concatenate %114, %115 in 1 : vector<8x8xf32>, vector<8x120xf32> -> vector<8x128xf32>
    %c0_56 = arith.constant 0 : index
    %c0_57 = arith.constant 0 : index
    %117 = vector.load %arg2[%c0_56, %c0_57] : memref<8x128xf32, #tpu.memory_space<vmem>>, vector<8x128xf32>
    tpu.vector_store %arg2[%c0_56, %c0_57], %116 {strides = array<i32>} : memref<8x128xf32, #tpu.memory_space<vmem>>, vector<8x128xf32>,
    return
  }
}

</mosaic_0001>

<llo_original>
// kernel: tpu_custom_call.1
$region0: #{tpu_custom_call.1}
  #allocation0 [shape = 'u32[]', space=smem, size = 0x4, offset = 0x4, fixed_abs, tag = 'smem constant byte address 0x4 - core index']
  #allocation1 [shape = 'u32[72,128]{1,0:T(1,128)}', space=vmem, size = 0x9000, scoped, tag = 'internal scratch']
  %s0 = inlined_call_operand.hbm [shape: f32[16,16], index: 0, kind: input, shape index: {}]
  %s1 = inlined_call_operand.hbm [shape: f32[40,128], index: 1, kind: input, shape index: {}]
  %s2 = inlined_call_operand.hbm [shape: f32[8,128], index: 2, kind: output, shape index: {}]
  %s3 = sld [smem:[#allocation0]]
  $region26: #{tpu_custom_call.1} parent=0
    _
  %s5 = ssub.s32 1, %s3
  %s6 = scalar_select 0, %s5, %s3
  $region1: #{tpu_custom_call.1} parent=0
    #allocation2 [shape = 'u8[8192]{0}', space=vmem, size = 0x2000, scoped, tag = 'input window, operand 0, single buffered']
    #allocation3 [shape = 's32[1]{0}', space=sflag, size = 0x4, scoped, tag = 'scoped memory for tpu_custom_call.1']
    #allocation4 [shape = 's32[1]{0}', space=sflag, size = 0x4, scoped, tag = 'scoped memory for tpu_custom_call.1']
    #allocation5 [shape = 'u8[20480]{0}', space=vmem, size = 0x5000, scoped, tag = 'input window, operand 1, single buffered']
    #allocation6 [shape = 's32[1]{0}', space=sflag, size = 0x4, scoped, tag = 'scoped memory for tpu_custom_call.1']
    #allocation7 [shape = 'u8[4096]{0}', space=vmem, size = 0x1000, scoped, tag = 'output window, operand 0, single buffered']
    %7 = vsyncpa [#allocation3], 0
    %8 = vsyncpa [#allocation6], 0
    %9 = vsyncpa [#allocation4], 0
    // Predicated region
    $region2: #{tpu_custom_call.1} parent=1 // pred_check
      _
    $region3: #{tpu_custom_call.1} parent=1 // pred_check_branch
      %11 = sbr.rel (0) target = $region5
    $region4: #{tpu_custom_call.1} parent=1 // pred_region
      %13 = vsyncadd [#allocation3], 0
      %s14 = sshll.u32 %s0, 4
      %s15 = int_to_ptr.hbm [resolvable:$true] %s14
      %s16 = sshll.u32 [#allocation2], 4
      %s17 = int_to_ptr.vmem [resolvable:$true] %s16
      %22 = dma.hbm_to_vmem [thread:$0]  %s15, 256, %s17, [#allocation3], 128, 128, 8
    $region5: #{tpu_custom_call.1} parent=1 // pred_fallthru
      _
    // Predicated region
    $region6: #{tpu_custom_call.1} parent=1 // pred_check
      _
    $region7: #{tpu_custom_call.1} parent=1 // pred_check_branch
      %24 = sbr.rel (0) target = $region9
    $region8: #{tpu_custom_call.1} parent=1 // pred_region
      %26 = vsyncadd [#allocation6], 0
      %s27 = sshll.u32 %s1, 4
      %s28 = int_to_ptr.hbm [resolvable:$true] %s27
      %s29 = sshll.u32 [#allocation5], 4
      %s30 = int_to_ptr.vmem [resolvable:$true] %s29
      %35 = dma.hbm_to_vmem [thread:$0]  %s28, 640, %s30, [#allocation6], 128, 128, 8
    $region9: #{tpu_custom_call.1} parent=1 // pred_fallthru
      _
    // Predicated region
    $region10: #{tpu_custom_call.1} parent=1 // pred_check
      _
    $region11: #{tpu_custom_call.1} parent=1 // pred_check_branch
      %37 = sbr.rel (0) target = $region13
    $region12: #{tpu_custom_call.1} parent=1 // pred_region
      %39 = dma.done [#allocation3], 256
    $region13: #{tpu_custom_call.1} parent=1 // pred_fallthru
      _
    // Predicated region
    $region14: #{tpu_custom_call.1} parent=1 // pred_check
      _
    $region15: #{tpu_custom_call.1} parent=1 // pred_check_branch
      %41 = sbr.rel (0) target = $region17
    $region16: #{tpu_custom_call.1} parent=1 // pred_region
      %43 = dma.done [#allocation6], 640
    $region17: #{tpu_custom_call.1} parent=1 // pred_fallthru
      _
    %v44 = vld [vmem:[#allocation2] sm:$0xff]
    %v45 = vld [vmem:[#allocation2 + $0x8] sm:$0xff]
    %v46 = vld [vmem:[#allocation5] sm:$0xff]
    %v47 = vld [vmem:[#allocation5 + $0x8] sm:$0xff]
    %v48 = vld [vmem:[#allocation5 + $0x20] sm:$0x1]
    %v49 = vperm.slane %v48, 0
    %vm50 = vcmask 130048
    %v52 = vsel %vm50, %v44, 0
    %v55 = vsel %vm50, %v45, 0
    %57 = vmatpush.msra.mxu0 0.0
    %58 = vmatpush.msra.mxu0 0.0
    %59 = vmatpush.msra.mxu0 0.0
    %60 = vmatpush.msra.mxu0 0.0
    %61 = vmatpush.msra.mxu0 0.0
    %62 = vmatpush.msra.mxu0 0.0
    %63 = vmatpush.msra.mxu0 0.0
    %64 = vmatpush.msra.mxu0 0.0
    %65 = vmatpush.msra.mxu0 0.0
    %66 = vmatpush.msra.mxu0 0.0
    %67 = vmatpush.msra.mxu0 0.0
    %68 = vmatpush.msra.mxu0 0.0
    %69 = vmatpush.msra.mxu0 0.0
    %70 = vmatpush.msra.mxu0 0.0
    %71 = vmatpush.msra.mxu0 %v47
    %72 = vmatpush.msra.mxu0 %v46
    %73 = vmatmul.f32.gmra.mxu0 %v52
    %v74 = vpop.f32.mrf.mxu0
    %v75 = vadd.f32 %v49, %v74
    %76 = vmatmul.f32.gmra.mxu0 %v55
    %v77 = vpop.f32.mrf.mxu0
    %v78 = vadd.f32 %v49, %v77
    %79 = vdwg.mxu0
    %82 = vrot.lane.b32.xlu0 %v75, 112
    %v83 = vpop.permute.xlu0 %82
    %84 = vrot.lane.b32.xlu0 %v78, 112
    %v85 = vpop.permute.xlu0 %84
    %86 = vrot.lane.b32.xlu0 %v75, 96
    %v87 = vpop.permute.xlu0 %86
    %88 = vrot.lane.b32.xlu0 %v78, 96
    %v89 = vpop.permute.xlu0 %88
    %90 = vrot.lane.b32.xlu0 %v75, 80
    %v91 = vpop.permute.xlu0 %90
    %92 = vrot.lane.b32.xlu0 %v78, 80
    %v93 = vpop.permute.xlu0 %92
    %94 = vrot.lane.b32.xlu0 %v75, 124
    %v95 = vpop.permute.xlu0 %94
    %vm96 = vcmask 31744
    %v97 = vsel %vm96, %v75, 0
    %v99 = vsel %vm96, %v95, 0
    %101 = vmatpush.xpose.msra.mxu0 0.0
    %102 = vmatpush.xpose.msra.mxu0 0.0
    %103 = vmatpush.xpose.msra.mxu0 0.0
    %104 = vmatpush.xpose.msra.mxu0 0.0
    %105 = vmatpush.xpose.msra.mxu0 0.0
    %106 = vmatpush.xpose.msra.mxu0 0.0
    %107 = vmatpush.xpose.msra.mxu0 0.0
    %108 = vmatpush.xpose.msra.mxu0 0.0
    %109 = vmatpush.xpose.msra.mxu0 0.0
    %110 = vmatpush.xpose.msra.mxu0 0.0
    %111 = vmatpush.xpose.msra.mxu0 0.0
    %112 = vmatpush.xpose.msra.mxu0 0.0
    %113 = vmatpush.xpose.msra.mxu0 0.0
    %114 = vmatpush.xpose.msra.mxu0 0.0
    %115 = vmatpush.xpose.msra.mxu0 0.0
    %116 = vmatpush.xpose.msra.mxu0 %v99
    %117 = vmatmul.f32.gmra.mxu0 %v97
    %v118 = vpop.f32.mrf.mxu0
    %v119 = vadd.f32 0.0, %v118
    %120 = vdwg.mxu0
    %121 = vrot.lane.b32.xlu0 %v78, 124
    %v122 = vpop.permute.xlu0 %121
    %v123 = vsel %vm96, %v78, 0
    %v125 = vsel %vm96, %v122, 0
    %127 = vmatpush.xpose.msra.mxu0 0.0
    %128 = vmatpush.xpose.msra.mxu0 0.0
    %129 = vmatpush.xpose.msra.mxu0 0.0
    %130 = vmatpush.xpose.msra.mxu0 0.0
    %131 = vmatpush.xpose.msra.mxu0 0.0
    %132 = vmatpush.xpose.msra.mxu0 0.0
    %133 = vmatpush.xpose.msra.mxu0 0.0
    %134 = vmatpush.xpose.msra.mxu0 0.0
    %135 = vmatpush.xpose.msra.mxu0 0.0
    %136 = vmatpush.xpose.msra.mxu0 0.0
    %137 = vmatpush.xpose.msra.mxu0 0.0
    %138 = vmatpush.xpose.msra.mxu0 0.0
    %139 = vmatpush.xpose.msra.mxu0 0.0
    %140 = vmatpush.xpose.msra.mxu0 0.0
    %141 = vmatpush.xpose.msra.mxu0 0.0
    %142 = vmatpush.xpose.msra.mxu0 %v125
    %143 = vmatmul.f32.gmra.mxu0 %v123
    %v144 = vpop.f32.mrf.mxu0
    %v145 = vadd.f32 0.0, %v144
    %146 = vdwg.mxu0
    %147 = vrot.lane.b32.xlu0 %v83, 124
    %v148 = vpop.permute.xlu0 %147
    %v149 = vsel %vm96, %v83, 0
    %v151 = vsel %vm96, %v148, 0
    %153 = vmatpush.xpose.msra.mxu0 0.0
    %154 = vmatpush.xpose.msra.mxu0 0.0
    %155 = vmatpush.xpose.msra.mxu0 0.0
    %156 = vmatpush.xpose.msra.mxu0 0.0
    %157 = vmatpush.xpose.msra.mxu0 0.0
    %158 = vmatpush.xpose.msra.mxu0 0.0
    %159 = vmatpush.xpose.msra.mxu0 0.0
    %160 = vmatpush.xpose.msra.mxu0 0.0
    %161 = vmatpush.xpose.msra.mxu0 0.0
    %162 = vmatpush.xpose.msra.mxu0 0.0
    %163 = vmatpush.xpose.msra.mxu0 0.0
    %164 = vmatpush.xpose.msra.mxu0 0.0
    %165 = vmatpush.xpose.msra.mxu0 0.0
    %166 = vmatpush.xpose.msra.mxu0 0.0
    %167 = vmatpush.xpose.msra.mxu0 0.0
    %168 = vmatpush.xpose.msra.mxu0 %v151
    %169 = vmatmul.f32.gmra.mxu0 %v149
    %v170 = vpop.f32.mrf.mxu0
    %v171 = vadd.f32 0.0, %v170
    %172 = vdwg.mxu0
    %173 = vrot.lane.b32.xlu0 %v85, 124
    %v174 = vpop.permute.xlu0 %173
    %v175 = vsel %vm96, %v85, 0
    %v177 = vsel %vm96, %v174, 0
    %179 = vmatpush.xpose.msra.mxu0 0.0
    %180 = vmatpush.xpose.msra.mxu0 0.0
    %181 = vmatpush.xpose.msra.mxu0 0.0
    %182 = vmatpush.xpose.msra.mxu0 0.0
    %183 = vmatpush.xpose.msra.mxu0 0.0
    %184 = vmatpush.xpose.msra.mxu0 0.0
    %185 = vmatpush.xpose.msra.mxu0 0.0
    %186 = vmatpush.xpose.msra.mxu0 0.0
    %187 = vmatpush.xpose.msra.mxu0 0.0
    %188 = vmatpush.xpose.msra.mxu0 0.0
    %189 = vmatpush.xpose.msra.mxu0 0.0
    %190 = vmatpush.xpose.msra.mxu0 0.0
    %191 = vmatpush.xpose.msra.mxu0 0.0
    %192 = vmatpush.xpose.msra.mxu0 0.0
    %193 = vmatpush.xpose.msra.mxu0 0.0
    %194 = vmatpush.xpose.msra.mxu0 %v177
    %195 = vmatmul.f32.gmra.mxu0 %v175
    %v196 = vpop.f32.mrf.mxu0
    %v197 = vadd.f32 0.0, %v196
    %198 = vdwg.mxu0
    %199 = vrot.lane.b32.xlu0 %v87, 124
    %v200 = vpop.permute.xlu0 %199
    %v201 = vsel %vm96, %v87, 0
    %v203 = vsel %vm96, %v200, 0
    %205 = vmatpush.xpose.msra.mxu0 0.0
    %206 = vmatpush.xpose.msra.mxu0 0.0
    %207 = vmatpush.xpose.msra.mxu0 0.0
    %208 = vmatpush.xpose.msra.mxu0 0.0
    %209 = vmatpush.xpose.msra.mxu0 0.0
    %210 = vmatpush.xpose.msra.mxu0 0.0
    %211 = vmatpush.xpose.msra.mxu0 0.0
    %212 = vmatpush.xpose.msra.mxu0 0.0
    %213 = vmatpush.xpose.msra.mxu0 0.0
    %214 = vmatpush.xpose.msra.mxu0 0.0
    %215 = vmatpush.xpose.msra.mxu0 0.0
    %216 = vmatpush.xpose.msra.mxu0 0.0
    %217 = vmatpush.xpose.msra.mxu0 0.0
    %218 = vmatpush.xpose.msra.mxu0 0.0
    %219 = vmatpush.xpose.msra.mxu0 0.0
    %220 = vmatpush.xpose.msra.mxu0 %v203
    %221 = vmatmul.f32.gmra.mxu0 %v201
    %v222 = vpop.f32.mrf.mxu0
    %v223 = vadd.f32 0.0, %v222
    %224 = vdwg.mxu0
    %225 = vrot.lane.b32.xlu0 %v89, 124
    %v226 = vpop.permute.xlu0 %225
    %v227 = vsel %vm96, %v89, 0
    %v229 = vsel %vm96, %v226, 0
    %231 = vmatpush.xpose.msra.mxu0 0.0
    %232 = vmatpush.xpose.msra.mxu0 0.0
    %233 = vmatpush.xpose.msra.mxu0 0.0
    %234 = vmatpush.xpose.msra.mxu0 0.0
    %235 = vmatpush.xpose.msra.mxu0 0.0
    %236 = vmatpush.xpose.msra.mxu0 0.0
    %237 = vmatpush.xpose.msra.mxu0 0.0
    %238 = vmatpush.xpose.msra.mxu0 0.0
    %239 = vmatpush.xpose.msra.mxu0 0.0
    %240 = vmatpush.xpose.msra.mxu0 0.0
    %241 = vmatpush.xpose.msra.mxu0 0.0
    %242 = vmatpush.xpose.msra.mxu0 0.0
    %243 = vmatpush.xpose.msra.mxu0 0.0
    %244 = vmatpush.xpose.msra.mxu0 0.0
    %245 = vmatpush.xpose.msra.mxu0 0.0
    %246 = vmatpush.xpose.msra.mxu0 %v229
    %247 = vmatmul.f32.gmra.mxu0 %v227
    %v248 = vpop.f32.mrf.mxu0
    %v249 = vadd.f32 0.0, %v248
    %250 = vdwg.mxu0
    %251 = vrot.lane.b32.xlu0 %v91, 124
    %v252 = vpop.permute.xlu0 %251
    %v253 = vsel %vm96, %v91, 0
    %v255 = vsel %vm96, %v252, 0
    %257 = vmatpush.xpose.msra.mxu0 0.0
    %258 = vmatpush.xpose.msra.mxu0 0.0
    %259 = vmatpush.xpose.msra.mxu0 0.0
    %260 = vmatpush.xpose.msra.mxu0 0.0
    %261 = vmatpush.xpose.msra.mxu0 0.0
    %262 = vmatpush.xpose.msra.mxu0 0.0
    %263 = vmatpush.xpose.msra.mxu0 0.0
    %264 = vmatpush.xpose.msra.mxu0 0.0
    %265 = vmatpush.xpose.msra.mxu0 0.0
    %266 = vmatpush.xpose.msra.mxu0 0.0
    %267 = vmatpush.xpose.msra.mxu0 0.0
    %268 = vmatpush.xpose.msra.mxu0 0.0
    %269 = vmatpush.xpose.msra.mxu0 0.0
    %270 = vmatpush.xpose.msra.mxu0 0.0
    %271 = vmatpush.xpose.msra.mxu0 0.0
    %272 = vmatpush.xpose.msra.mxu0 %v255
    %273 = vmatmul.f32.gmra.mxu0 %v253
    %v274 = vpop.f32.mrf.mxu0
    %v275 = vadd.f32 0.0, %v274
    %276 = vdwg.mxu0
    %277 = vrot.lane.b32.xlu0 %v93, 124
    %v278 = vpop.permute.xlu0 %277
    %v279 = vsel %vm96, %v93, 0
    %v281 = vsel %vm96, %v278, 0
    %283 = vmatpush.xpose.msra.mxu0 0.0
    %284 = vmatpush.xpose.msra.mxu0 0.0
    %285 = vmatpush.xpose.msra.mxu0 0.0
    %286 = vmatpush.xpose.msra.mxu0 0.0
    %287 = vmatpush.xpose.msra.mxu0 0.0
    %288 = vmatpush.xpose.msra.mxu0 0.0
    %289 = vmatpush.xpose.msra.mxu0 0.0
    %290 = vmatpush.xpose.msra.mxu0 0.0
    %291 = vmatpush.xpose.msra.mxu0 0.0
    %292 = vmatpush.xpose.msra.mxu0 0.0
    %293 = vmatpush.xpose.msra.mxu0 0.0
    %294 = vmatpush.xpose.msra.mxu0 0.0
    %295 = vmatpush.xpose.msra.mxu0 0.0
    %296 = vmatpush.xpose.msra.mxu0 0.0
    %297 = vmatpush.xpose.msra.mxu0 0.0
    %298 = vmatpush.xpose.msra.mxu0 %v281
    %299 = vmatmul.f32.gmra.mxu0 %v279
    %v300 = vpop.f32.mrf.mxu0
    %v301 = vadd.f32 0.0, %v300
    %302 = vdwg.mxu0
    %vm303 = vcmask 64512
    %v304 = vsel %vm303, %v119, -inf
    %305 = vmax.xlane.f32.xlu0 %v304
    %v306 = vpop.xlane.xlu0 %305
    %v307 = vsel %vm303, %v145, -inf
    %308 = vmax.xlane.f32.xlu0 %v307
    %v309 = vpop.xlane.xlu0 %308
    %v310 = vsel %vm303, %v171, -inf
    %311 = vmax.xlane.f32.xlu0 %v310
    %v312 = vpop.xlane.xlu0 %311
    %v313 = vsel %vm303, %v197, -inf
    %314 = vmax.xlane.f32.xlu0 %v313
    %v315 = vpop.xlane.xlu0 %314
    %v316 = vsel %vm303, %v223, -inf
    %317 = vmax.xlane.f32.xlu0 %v316
    %v318 = vpop.xlane.xlu0 %317
    %v319 = vsel %vm303, %v249, -inf
    %320 = vmax.xlane.f32.xlu0 %v319
    %v321 = vpop.xlane.xlu0 %320
    %v322 = vsel %vm303, %v275, -inf
    %323 = vmax.xlane.f32.xlu0 %v322
    %v324 = vpop.xlane.xlu0 %323
    %v325 = vsel %vm303, %v301, -inf
    %326 = vmax.xlane.f32.xlu0 %v325
    %v327 = vpop.xlane.xlu0 %326
    %v328 = vsub.f32 %v119, %v306
    %v329 = vsub.f32 %v145, %v309
    %v330 = vsub.f32 %v171, %v312
    %v331 = vsub.f32 %v197, %v315
    %v332 = vsub.f32 %v223, %v318
    %v333 = vsub.f32 %v249, %v321
    %v334 = vsub.f32 %v275, %v324
    %v335 = vsub.f32 %v301, %v327
    %v336 = vmul.f32 %v328, 1.442695
    %v337 = vpow.pop %v336
    %v338 = vmul.f32 %v329, 1.442695
    %v339 = vpow.pop %v338
    %v340 = vmul.f32 %v330, 1.442695
    %v341 = vpow.pop %v340
    %v342 = vmul.f32 %v331, 1.442695
    %v343 = vpow.pop %v342
    %v344 = vmul.f32 %v332, 1.442695
    %v345 = vpow.pop %v344
    %v346 = vmul.f32 %v333, 1.442695
    %v347 = vpow.pop %v346
    %v348 = vmul.f32 %v334, 1.442695
    %v349 = vpow.pop %v348
    %v350 = vmul.f32 %v335, 1.442695
    %v351 = vpow.pop %v350
    %v352 = vsel %vm303, %v337, 0.0
    %353 = vadd.xlane.f32.xlu0 %v352
    %v354 = vpop.xlane.xlu0 %353
    %v355 = vsel %vm303, %v339, 0.0
    %356 = vadd.xlane.f32.xlu0 %v355
    %v357 = vpop.xlane.xlu0 %356
    %v358 = vsel %vm303, %v341, 0.0
    %359 = vadd.xlane.f32.xlu0 %v358
    %v360 = vpop.xlane.xlu0 %359
    %v361 = vsel %vm303, %v343, 0.0
    %362 = vadd.xlane.f32.xlu0 %v361
    %v363 = vpop.xlane.xlu0 %362
    %v364 = vsel %vm303, %v345, 0.0
    %365 = vadd.xlane.f32.xlu0 %v364
    %v366 = vpop.xlane.xlu0 %365
    %v367 = vsel %vm303, %v347, 0.0
    %368 = vadd.xlane.f32.xlu0 %v367
    %v369 = vpop.xlane.xlu0 %368
    %v370 = vsel %vm303, %v349, 0.0
    %371 = vadd.xlane.f32.xlu0 %v370
    %v372 = vpop.xlane.xlu0 %371
    %v373 = vsel %vm303, %v351, 0.0
    %374 = vadd.xlane.f32.xlu0 %v373
    %v375 = vpop.xlane.xlu0 %374
    %v376 = vrcp.pop %v354
    %v377 = vrcp.pop %v357
    %v378 = vrcp.pop %v360
    %v379 = vrcp.pop %v363
    %v380 = vrcp.pop %v366
    %v381 = vrcp.pop %v369
    %v382 = vrcp.pop %v372
    %v383 = vrcp.pop %v375
    %v384 = vmul.f32 %v337, %v376
    %v385 = vmul.f32 %v339, %v377
    %v386 = vmul.f32 %v341, %v378
    %v387 = vmul.f32 %v343, %v379
    %v388 = vmul.f32 %v345, %v380
    %v389 = vmul.f32 %v347, %v381
    %v390 = vmul.f32 %v349, %v382
    %v391 = vmul.f32 %v351, %v383
    %392 = vrot.lane.b32.xlu0 %v75, 120
    %v393 = vpop.permute.xlu0 %392
    %v396 = vsel %vm303, %v384, 0
    %398 = vmatpush.msra.mxu0 0.0
    %399 = vmatpush.msra.mxu0 0.0
    %400 = vmatpush.msra.mxu0 0.0
    %401 = vmatpush.msra.mxu0 0.0
    %402 = vmatpush.msra.mxu0 0.0
    %403 = vmatpush.msra.mxu0 0.0
    %404 = vmatpush.msra.mxu0 0.0
    %405 = vmatpush.msra.mxu0 0.0
    %406 = vmatpush.msra.mxu0 0.0
    %407 = vmatpush.msra.mxu0 0.0
    %408 = vmatpush.msra.mxu0 0.0
    %409 = vmatpush.msra.mxu0 0.0
    %410 = vmatpush.msra.mxu0 0.0
    %411 = vmatpush.msra.mxu0 0.0
    %412 = vmatpush.msra.mxu0 0.0
    %413 = vmatpush.msra.mxu0 %v393
    %414 = vmatmul.f32.gmra.mxu0 %v396
    %v415 = vpop.f32.mrf.mxu0
    %v416 = vadd.f32 0.0, %v415
    %417 = vdwg.mxu0
    %418 = vrot.lane.b32.xlu0 %v78, 120
    %v419 = vpop.permute.xlu0 %418
    %v422 = vsel %vm303, %v385, 0
    %424 = vmatpush.msra.mxu0 0.0
    %425 = vmatpush.msra.mxu0 0.0
    %426 = vmatpush.msra.mxu0 0.0
    %427 = vmatpush.msra.mxu0 0.0
    %428 = vmatpush.msra.mxu0 0.0
    %429 = vmatpush.msra.mxu0 0.0
    %430 = vmatpush.msra.mxu0 0.0
    %431 = vmatpush.msra.mxu0 0.0
    %432 = vmatpush.msra.mxu0 0.0
    %433 = vmatpush.msra.mxu0 0.0
    %434 = vmatpush.msra.mxu0 0.0
    %435 = vmatpush.msra.mxu0 0.0
    %436 = vmatpush.msra.mxu0 0.0
    %437 = vmatpush.msra.mxu0 0.0
    %438 = vmatpush.msra.mxu0 0.0
    %439 = vmatpush.msra.mxu0 %v419
    %440 = vmatmul.f32.gmra.mxu0 %v422
    %v441 = vpop.f32.mrf.mxu0
    %v442 = vadd.f32 0.0, %v441
    %443 = vdwg.mxu0
    %444 = vrot.lane.b32.xlu0 %v83, 120
    %v445 = vpop.permute.xlu0 %444
    %v448 = vsel %vm303, %v386, 0
    %450 = vmatpush.msra.mxu0 0.0
    %451 = vmatpush.msra.mxu0 0.0
    %452 = vmatpush.msra.mxu0 0.0
    %453 = vmatpush.msra.mxu0 0.0
    %454 = vmatpush.msra.mxu0 0.0
    %455 = vmatpush.msra.mxu0 0.0
    %456 = vmatpush.msra.mxu0 0.0
    %457 = vmatpush.msra.mxu0 0.0
    %458 = vmatpush.msra.mxu0 0.0
    %459 = vmatpush.msra.mxu0 0.0
    %460 = vmatpush.msra.mxu0 0.0
    %461 = vmatpush.msra.mxu0 0.0
    %462 = vmatpush.msra.mxu0 0.0
    %463 = vmatpush.msra.mxu0 0.0
    %464 = vmatpush.msra.mxu0 0.0
    %465 = vmatpush.msra.mxu0 %v445
    %466 = vmatmul.f32.gmra.mxu0 %v448
    %v467 = vpop.f32.mrf.mxu0
    %v468 = vadd.f32 0.0, %v467
    %469 = vdwg.mxu0
    %470 = vrot.lane.b32.xlu0 %v85, 120
    %v471 = vpop.permute.xlu0 %470
    %v474 = vsel %vm303, %v387, 0
    %476 = vmatpush.msra.mxu0 0.0
    %477 = vmatpush.msra.mxu0 0.0
    %478 = vmatpush.msra.mxu0 0.0
    %479 = vmatpush.msra.mxu0 0.0
    %480 = vmatpush.msra.mxu0 0.0
    %481 = vmatpush.msra.mxu0 0.0
    %482 = vmatpush.msra.mxu0 0.0
    %483 = vmatpush.msra.mxu0 0.0
    %484 = vmatpush.msra.mxu0 0.0
    %485 = vmatpush.msra.mxu0 0.0
    %486 = vmatpush.msra.mxu0 0.0
    %487 = vmatpush.msra.mxu0 0.0
    %488 = vmatpush.msra.mxu0 0.0
    %489 = vmatpush.msra.mxu0 0.0
    %490 = vmatpush.msra.mxu0 0.0
    %491 = vmatpush.msra.mxu0 %v471
    %492 = vmatmul.f32.gmra.mxu0 %v474
    %v493 = vpop.f32.mrf.mxu0
    %v494 = vadd.f32 0.0, %v493
    %495 = vdwg.mxu0
    %496 = vrot.lane.b32.xlu0 %v87, 120
    %v497 = vpop.permute.xlu0 %496
    %v500 = vsel %vm303, %v388, 0
    %502 = vmatpush.msra.mxu0 0.0
    %503 = vmatpush.msra.mxu0 0.0
    %504 = vmatpush.msra.mxu0 0.0
    %505 = vmatpush.msra.mxu0 0.0
    %506 = vmatpush.msra.mxu0 0.0
    %507 = vmatpush.msra.mxu0 0.0
    %508 = vmatpush.msra.mxu0 0.0
    %509 = vmatpush.msra.mxu0 0.0
    %510 = vmatpush.msra.mxu0 0.0
    %511 = vmatpush.msra.mxu0 0.0
    %512 = vmatpush.msra.mxu0 0.0
    %513 = vmatpush.msra.mxu0 0.0
    %514 = vmatpush.msra.mxu0 0.0
    %515 = vmatpush.msra.mxu0 0.0
    %516 = vmatpush.msra.mxu0 0.0
    %517 = vmatpush.msra.mxu0 %v497
    %518 = vmatmul.f32.gmra.mxu0 %v500
    %v519 = vpop.f32.mrf.mxu0
    %v520 = vadd.f32 0.0, %v519
    %521 = vdwg.mxu0
    %522 = vrot.lane.b32.xlu0 %v89, 120
    %v523 = vpop.permute.xlu0 %522
    %v526 = vsel %vm303, %v389, 0
    %528 = vmatpush.msra.mxu0 0.0
    %529 = vmatpush.msra.mxu0 0.0
    %530 = vmatpush.msra.mxu0 0.0
    %531 = vmatpush.msra.mxu0 0.0
    %532 = vmatpush.msra.mxu0 0.0
    %533 = vmatpush.msra.mxu0 0.0
    %534 = vmatpush.msra.mxu0 0.0
    %535 = vmatpush.msra.mxu0 0.0
    %536 = vmatpush.msra.mxu0 0.0
    %537 = vmatpush.msra.mxu0 0.0
    %538 = vmatpush.msra.mxu0 0.0
    %539 = vmatpush.msra.mxu0 0.0
    %540 = vmatpush.msra.mxu0 0.0
    %541 = vmatpush.msra.mxu0 0.0
    %542 = vmatpush.msra.mxu0 0.0
    %543 = vmatpush.msra.mxu0 %v523
    %544 = vmatmul.f32.gmra.mxu0 %v526
    %v545 = vpop.f32.mrf.mxu0
    %v546 = vadd.f32 0.0, %v545
    %547 = vdwg.mxu0
    %548 = vrot.lane.b32.xlu0 %v91, 120
    %v549 = vpop.permute.xlu0 %548
    %v552 = vsel %vm303, %v390, 0
    %554 = vmatpush.msra.mxu0 0.0
    %555 = vmatpush.msra.mxu0 0.0
    %556 = vmatpush.msra.mxu0 0.0
    %557 = vmatpush.msra.mxu0 0.0
    %558 = vmatpush.msra.mxu0 0.0
    %559 = vmatpush.msra.mxu0 0.0
    %560 = vmatpush.msra.mxu0 0.0
    %561 = vmatpush.msra.mxu0 0.0
    %562 = vmatpush.msra.mxu0 0.0
    %563 = vmatpush.msra.mxu0 0.0
    %564 = vmatpush.msra.mxu0 0.0
    %565 = vmatpush.msra.mxu0 0.0
    %566 = vmatpush.msra.mxu0 0.0
    %567 = vmatpush.msra.mxu0 0.0
    %568 = vmatpush.msra.mxu0 0.0
    %569 = vmatpush.msra.mxu0 %v549
    %570 = vmatmul.f32.gmra.mxu0 %v552
    %v571 = vpop.f32.mrf.mxu0
    %v572 = vadd.f32 0.0, %v571
    %573 = vdwg.mxu0
    %574 = vrot.lane.b32.xlu0 %v93, 120
    %v575 = vpop.permute.xlu0 %574
    %v578 = vsel %vm303, %v391, 0
    %580 = vmatpush.msra.mxu0 0.0
    %581 = vmatpush.msra.mxu0 0.0
    %582 = vmatpush.msra.mxu0 0.0
    %583 = vmatpush.msra.mxu0 0.0
    %584 = vmatpush.msra.mxu0 0.0
    %585 = vmatpush.msra.mxu0 0.0
    %586 = vmatpush.msra.mxu0 0.0
    %587 = vmatpush.msra.mxu0 0.0
    %588 = vmatpush.msra.mxu0 0.0
    %589 = vmatpush.msra.mxu0 0.0
    %590 = vmatpush.msra.mxu0 0.0
    %591 = vmatpush.msra.mxu0 0.0
    %592 = vmatpush.msra.mxu0 0.0
    %593 = vmatpush.msra.mxu0 0.0
    %594 = vmatpush.msra.mxu0 0.0
    %595 = vmatpush.msra.mxu0 %v575
    %596 = vmatmul.f32.gmra.mxu0 %v578
    %v597 = vpop.f32.mrf.mxu0
    %v598 = vadd.f32 0.0, %v597
    %599 = vdwg.mxu0
    %v600 = vld [vmem:[#allocation5 + $0x10] sm:$0xff]
    %v601 = vld [vmem:[#allocation5 + $0x18] sm:$0xff]
    %v604 = vrot.slane %v600, 4
    %v605 = vrot.slane %v601, 4
    %v606 = vld [vmem:[#allocation5 + $0x21] sm:$0x1]
    %v608 = vsel %vm96, %v416, 0
    %v611 = vsel %vm96, %v442, 0
    %vm613 = vcmask 1043456
    %v614 = vsel %vm613, %v600, 0
    %616 = vmatpush.msra.mxu0 0.0
    %617 = vmatpush.msra.mxu0 0.0
    %618 = vmatpush.msra.mxu0 0.0
    %619 = vmatpush.msra.mxu0 0.0
    %620 = vmatpush.msra.mxu0 0.0
    %621 = vmatpush.msra.mxu0 0.0
    %622 = vmatpush.msra.mxu0 0.0
    %623 = vmatpush.msra.mxu0 0.0
    %624 = vmatpush.msra.mxu0 0.0
    %625 = vmatpush.msra.mxu0 0.0
    %626 = vmatpush.msra.mxu0 0.0
    %627 = vmatpush.msra.mxu0 0.0
    %628 = vmatpush.msra.mxu0 0.0
    %629 = vmatpush.msra.mxu0 0.0
    %630 = vmatpush.msra.mxu0 0.0
    %631 = vmatpush.msra.mxu0 %v614
    %632 = vmatmul.f32.gmra.mxu0 %v608
    %v633 = vpop.f32.mrf.mxu0
    %v634 = vadd.f32 0.0, %v633
    %635 = vmatmul.f32.gmra.mxu0 %v611
    %v636 = vpop.f32.mrf.mxu0
    %v637 = vadd.f32 0.0, %v636
    %638 = vdwg.mxu0
    %v640 = vsel %vm96, %v468, 0
    %v643 = vsel %vm96, %v494, 0
    %v645 = vsel %vm613, %v604, 0
    %647 = vmatpush.msra.mxu0 0.0
    %648 = vmatpush.msra.mxu0 0.0
    %649 = vmatpush.msra.mxu0 0.0
    %650 = vmatpush.msra.mxu0 0.0
    %651 = vmatpush.msra.mxu0 0.0
    %652 = vmatpush.msra.mxu0 0.0
    %653 = vmatpush.msra.mxu0 0.0
    %654 = vmatpush.msra.mxu0 0.0
    %655 = vmatpush.msra.mxu0 0.0
    %656 = vmatpush.msra.mxu0 0.0
    %657 = vmatpush.msra.mxu0 0.0
    %658 = vmatpush.msra.mxu0 0.0
    %659 = vmatpush.msra.mxu0 0.0
    %660 = vmatpush.msra.mxu0 0.0
    %661 = vmatpush.msra.mxu0 0.0
    %662 = vmatpush.msra.mxu0 %v645
    %663 = vmatmul.f32.gmra.mxu0 %v640
    %v664 = vpop.f32.mrf.mxu0
    %v665 = vadd.f32 0.0, %v664
    %666 = vmatmul.f32.gmra.mxu0 %v643
    %v667 = vpop.f32.mrf.mxu0
    %v668 = vadd.f32 0.0, %v667
    %669 = vdwg.mxu0
    %v671 = vsel %vm96, %v520, 0
    %v674 = vsel %vm96, %v546, 0
    %v676 = vsel %vm613, %v601, 0
    %678 = vmatpush.msra.mxu0 0.0
    %679 = vmatpush.msra.mxu0 0.0
    %680 = vmatpush.msra.mxu0 0.0
    %681 = vmatpush.msra.mxu0 0.0
    %682 = vmatpush.msra.mxu0 0.0
    %683 = vmatpush.msra.mxu0 0.0
    %684 = vmatpush.msra.mxu0 0.0
    %685 = vmatpush.msra.mxu0 0.0
    %686 = vmatpush.msra.mxu0 0.0
    %687 = vmatpush.msra.mxu0 0.0
    %688 = vmatpush.msra.mxu0 0.0
    %689 = vmatpush.msra.mxu0 0.0
    %690 = vmatpush.msra.mxu0 0.0
    %691 = vmatpush.msra.mxu0 0.0
    %692 = vmatpush.msra.mxu0 0.0
    %693 = vmatpush.msra.mxu0 %v676
    %694 = vmatmul.f32.gmra.mxu0 %v671
    %v695 = vpop.f32.mrf.mxu0
    %v696 = vadd.f32 0.0, %v695
    %697 = vmatmul.f32.gmra.mxu0 %v674
    %v698 = vpop.f32.mrf.mxu0
    %v699 = vadd.f32 0.0, %v698
    %700 = vdwg.mxu0
    %v702 = vsel %vm96, %v572, 0
    %v705 = vsel %vm96, %v598, 0
    %v707 = vsel %vm613, %v605, 0
    %709 = vmatpush.msra.mxu0 0.0
    %710 = vmatpush.msra.mxu0 0.0
    %711 = vmatpush.msra.mxu0 0.0
    %712 = vmatpush.msra.mxu0 0.0
    %713 = vmatpush.msra.mxu0 0.0
    %714 = vmatpush.msra.mxu0 0.0
    %715 = vmatpush.msra.mxu0 0.0
    %716 = vmatpush.msra.mxu0 0.0
    %717 = vmatpush.msra.mxu0 0.0
    %718 = vmatpush.msra.mxu0 0.0
    %719 = vmatpush.msra.mxu0 0.0
    %720 = vmatpush.msra.mxu0 0.0
    %721 = vmatpush.msra.mxu0 0.0
    %722 = vmatpush.msra.mxu0 0.0
    %723 = vmatpush.msra.mxu0 0.0
    %724 = vmatpush.msra.mxu0 %v707
    %725 = vmatmul.f32.gmra.mxu0 %v702
    %v726 = vpop.f32.mrf.mxu0
    %v727 = vadd.f32 0.0, %v726
    %728 = vmatmul.f32.gmra.mxu0 %v705
    %v729 = vpop.f32.mrf.mxu0
    %v730 = vadd.f32 0.0, %v729
    %731 = vdwg.mxu0
    %v732 = vsel %vm50, %v634, 0.0
    %v733 = vsel %vm50, %v665, 0.0
    %v734 = vadd.f32 %v732, %v733
    %v735 = vsel %vm50, %v696, 0.0
    %v736 = vadd.f32 %v734, %v735
    %v737 = vsel %vm50, %v727, 0.0
    %v738 = vadd.f32 %v736, %v737
    %v739 = vsel %vm50, %v637, 0.0
    %v740 = vsel %vm50, %v668, 0.0
    %v741 = vadd.f32 %v739, %v740
    %v742 = vsel %vm50, %v699, 0.0
    %v743 = vadd.f32 %v741, %v742
    %v744 = vsel %vm50, %v730, 0.0
    %v745 = vadd.f32 %v743, %v744
    %v746 = vperm.slane %v606, 0
    %v747 = vadd.f32 %v738, %v746
    %v748 = vadd.f32 %v745, %v746
    %v749 = vadd.f32 %v44, %v747
    %v750 = vadd.f32 %v45, %v748
    %v751 = vld [vmem:[#allocation5 + $0x21] sm:$0x1]
    %v752 = vsel %vm50, %v749, 0.0
    %753 = vadd.xlane.f32.xlu0 %v752
    %v754 = vpop.xlane.xlu0 %753
    %v755 = vsel %vm50, %v750, 0.0
    %756 = vadd.xlane.f32.xlu0 %v755
    %v757 = vpop.xlane.xlu0 %756
    %v758 = vrcp.pop 16.0
    %v759 = vmul.f32 16.0, %v758
    %v760 = vsub.f32 1.0, %v759
    %v761 = vmul.f32 %v758, %v760
    %v762 = vadd.f32 %v758, %v761
    %vm763 = vweird.f32 %v758
    %v764 = vsel %vm763, %v758, %v762
    %v765 = vmul.f32 %v754, %v764
    %v766 = vmul.f32 %v757, %v764
    %v767 = vsub.f32 %v749, %v765
    %v768 = vsub.f32 %v750, %v766
    %v769 = vmul.f32 %v767, %v767
    %v770 = vmul.f32 %v768, %v768
    %v771 = vsel %vm50, %v769, 0.0
    %772 = vadd.xlane.f32.xlu0 %v771
    %v773 = vpop.xlane.xlu0 %772
    %v774 = vsel %vm50, %v770, 0.0
    %775 = vadd.xlane.f32.xlu0 %v774
    %v776 = vpop.xlane.xlu0 %775
    %v777 = vmul.f32 %v773, %v764
    %v778 = vmul.f32 %v776, %v764
    %v779 = vadd.f32 %v777, 1e-05
    %v780 = vadd.f32 %v778, 1e-05
    %v781 = vrsqrt.pop %v779
    %v782 = vmul.f32 %v781, %v779
    %v783 = vmul.f32 %v782, %v781
    %v784 = vmul.f32 0.5, %v783
    %v785 = vsub.f32 1.5, %v784
    %v786 = vmul.f32 %v781, %v785
    %vm787 = vweird.f32 %v779
    %vm788 = vweird.f32 %v781
    %vm789 = vmor %vm787, %vm788
    %v790 = vsel %vm789, %v781, %v786
    %v791 = vrsqrt.pop %v780
    %v792 = vmul.f32 %v791, %v780
    %v793 = vmul.f32 %v792, %v791
    %v794 = vmul.f32 0.5, %v793
    %v795 = vsub.f32 1.5, %v794
    %v796 = vmul.f32 %v791, %v795
    %vm797 = vweird.f32 %v780
    %vm798 = vweird.f32 %v791
    %vm799 = vmor %vm797, %vm798
    %v800 = vsel %vm799, %v791, %v796
    %v801 = vmul.f32 %v767, %v790
    %v802 = vmul.f32 %v768, %v800
    %v803 = vperm.slane %v751, 0
    %805 = vrot.lane.b32.xlu0 %v803, 112
    %v806 = vpop.permute.xlu0 %805
    %v808 = vmul.f32 %v801, %v806
    %v809 = vmul.f32 %v802, %v806
    %810 = vrot.lane.b32.xlu0 %v803, 96
    %v811 = vpop.permute.xlu0 %810
    %v813 = vadd.f32 %v808, %v811
    %v814 = vadd.f32 %v809, %v811
    %v815 = vld [vmem:[#allocation5 + $0x10] sm:$0xff]
    %v816 = vld [vmem:[#allocation5 + $0x18] sm:$0xff]
    %819 = vrot.lane.b32.xlu0 %v815, 112
    %v820 = vpop.permute.xlu0 %819
    %821 = vrot.lane.b32.xlu0 %v816, 112
    %v822 = vpop.permute.xlu0 %821
    %825 = vrot.lane.b32.xlu0 %v803, 32
    %v826 = vpop.permute.xlu0 %825
    %v829 = vsel %vm50, %v813, 0
    %v832 = vsel %vm50, %v814, 0
    %834 = vmatpush.msra.mxu0 0.0
    %835 = vmatpush.msra.mxu0 0.0
    %836 = vmatpush.msra.mxu0 0.0
    %837 = vmatpush.msra.mxu0 0.0
    %838 = vmatpush.msra.mxu0 0.0
    %839 = vmatpush.msra.mxu0 0.0
    %840 = vmatpush.msra.mxu0 0.0
    %841 = vmatpush.msra.mxu0 0.0
    %842 = vmatpush.msra.mxu0 0.0
    %843 = vmatpush.msra.mxu0 0.0
    %844 = vmatpush.msra.mxu0 0.0
    %845 = vmatpush.msra.mxu0 0.0
    %846 = vmatpush.msra.mxu0 0.0
    %847 = vmatpush.msra.mxu0 0.0
    %848 = vmatpush.msra.mxu0 %v822
    %849 = vmatpush.msra.mxu0 %v820
    %850 = vmatmul.f32.gmra.mxu0 %v829
    %v851 = vpop.f32.mrf.mxu0
    %v852 = vadd.f32 %v826, %v851
    %853 = vmatmul.f32.gmra.mxu0 %v832
    %v854 = vpop.f32.mrf.mxu0
    %v855 = vadd.f32 %v826, %v854
    %856 = vdwg.mxu0
    %v857 = vmax.f32 %v852, 0.0
    %v858 = vmax.f32 %v855, 0.0
    %859 = vrot.lane.b32.xlu0 %v815, 80
    %v860 = vpop.permute.xlu0 %859
    %861 = vrot.lane.b32.xlu0 %v816, 80
    %v862 = vpop.permute.xlu0 %861
    %863 = vrot.lane.b32.xlu0 %v820, 80
    %v864 = vpop.permute.xlu0 %863
    %865 = vrot.lane.b32.xlu0 %v822, 80
    %v866 = vpop.permute.xlu0 %865
    %871 = vrot.lane.b32.xlu0 %v803, 48
    %v872 = vpop.permute.xlu0 %871
    %vm874 = vcmask 261120
    %v876 = vsel %vm874, %v857, 0
    %v879 = vsel %vm874, %v858, 0
    %881 = vmatpush.msra.mxu0 0.0
    %882 = vmatpush.msra.mxu0 0.0
    %883 = vmatpush.msra.mxu0 0.0
    %884 = vmatpush.msra.mxu0 0.0
    %885 = vmatpush.msra.mxu0 0.0
    %886 = vmatpush.msra.mxu0 0.0
    %887 = vmatpush.msra.mxu0 0.0
    %888 = vmatpush.msra.mxu0 0.0
    %889 = vmatpush.msra.mxu0 0.0
    %890 = vmatpush.msra.mxu0 0.0
    %891 = vmatpush.msra.mxu0 0.0
    %892 = vmatpush.msra.mxu0 0.0
    %893 = vmatpush.msra.mxu0 %v866
    %894 = vmatpush.msra.mxu0 %v864
    %895 = vmatpush.msra.mxu0 %v862
    %896 = vmatpush.msra.mxu0 %v860
    %897 = vmatmul.f32.gmra.mxu0 %v876
    %v898 = vpop.f32.mrf.mxu0
    %v899 = vadd.f32 %v872, %v898
    %900 = vmatmul.f32.gmra.mxu0 %v879
    %v901 = vpop.f32.mrf.mxu0
    %v902 = vadd.f32 %v872, %v901
    %903 = vdwg.mxu0
    %v904 = vadd.f32 %v813, %v899
    %v905 = vadd.f32 %v814, %v902
    %v906 = vsel %vm50, %v904, 0.0
    %907 = vadd.xlane.f32.xlu0 %v906
    %v908 = vpop.xlane.xlu0 %907
    %v909 = vsel %vm50, %v905, 0.0
    %910 = vadd.xlane.f32.xlu0 %v909
    %v911 = vpop.xlane.xlu0 %910
    %v912 = vmul.f32 %v908, %v764
    %v913 = vmul.f32 %v911, %v764
    %v914 = vsub.f32 %v904, %v912
    %v915 = vsub.f32 %v905, %v913
    %v916 = vmul.f32 %v914, %v914
    %v917 = vmul.f32 %v915, %v915
    %v918 = vsel %vm50, %v916, 0.0
    %919 = vadd.xlane.f32.xlu0 %v918
    %v920 = vpop.xlane.xlu0 %919
    %v921 = vsel %vm50, %v917, 0.0
    %922 = vadd.xlane.f32.xlu0 %v921
    %v923 = vpop.xlane.xlu0 %922
    %v924 = vmul.f32 %v920, %v764
    %v925 = vmul.f32 %v923, %v764
    %v926 = vadd.f32 %v924, 1e-05
    %v927 = vadd.f32 %v925, 1e-05
    %v928 = vrsqrt.pop %v926
    %v929 = vmul.f32 %v928, %v926
    %v930 = vmul.f32 %v929, %v928
    %v931 = vmul.f32 0.5, %v930
    %v932 = vsub.f32 1.5, %v931
    %v933 = vmul.f32 %v928, %v932
    %vm934 = vweird.f32 %v926
    %vm935 = vweird.f32 %v928
    %vm936 = vmor %vm934, %vm935
    %v937 = vsel %vm936, %v928, %v933
    %v938 = vrsqrt.pop %v927
    %v939 = vmul.f32 %v938, %v927
    %v940 = vmul.f32 %v939, %v938
    %v941 = vmul.f32 0.5, %v940
    %v942 = vsub.f32 1.5, %v941
    %v943 = vmul.f32 %v938, %v942
    %vm944 = vweird.f32 %v927
    %vm945 = vweird.f32 %v938
    %vm946 = vmor %vm944, %vm945
    %v947 = vsel %vm946, %v938, %v943
    %v948 = vmul.f32 %v914, %v937
    %v949 = vmul.f32 %v915, %v947
    %950 = vrot.lane.b32.xlu0 %v803, 80
    %v951 = vpop.permute.xlu0 %950
    %v953 = vmul.f32 %v948, %v951
    %v954 = vmul.f32 %v949, %v951
    %955 = vrot.lane.b32.xlu0 %v803, 64
    %v956 = vpop.permute.xlu0 %955
    %v958 = vadd.f32 %v953, %v956
    %v959 = vadd.f32 %v954, %v956
    %v960 = vsel %vm50, %v958, 0.0
    %v961 = vrot.slane %v960, 4
    %v962 = vadd.f32 %v960, %v961
    %v963 = vrot.slane %v962, 2
    %v964 = vadd.f32 %v962, %v963
    %v965 = vrot.slane %v964, 1
    %v966 = vadd.f32 %v964, %v965
    %v967 = vsel %vm50, %v959, 0.0
    %v968 = vrot.slane %v967, 4
    %v969 = vadd.f32 %v967, %v968
    %v970 = vrot.slane %v969, 2
    %v971 = vadd.f32 %v969, %v970
    %v972 = vrot.slane %v971, 1
    %v973 = vadd.f32 %v971, %v972
    %vm976 = vcmask 1041409
    %v977 = vsel %vm976, %v973, %v966
    %vm979 = vcmask 1041408
    %v980 = vsel %vm979, %v977, 0.0
    %v981 = vld [vmem:[#allocation5] sm:$0xff]
    %v982 = vld [vmem:[#allocation5 + $0x8] sm:$0xff]
    %v983 = vld [vmem:[#allocation5 + $0x20] sm:$0x1]
    %v984 = vperm.slane %v983, 0
    %987 = vrot.lane.b32.xlu0 %v981, 64
    %v988 = vpop.permute.xlu0 %987
    %989 = vrot.lane.b32.xlu0 %v982, 64
    %v990 = vpop.permute.xlu0 %989
    %994 = vrot.lane.b32.xlu0 %v984, 64
    %v995 = vpop.permute.xlu0 %994
    %v998 = vsel %vm50, %v980, 0
    %1000 = vmatpush.msra.mxu0 0.0
    %1001 = vmatpush.msra.mxu0 0.0
    %1002 = vmatpush.msra.mxu0 0.0
    %1003 = vmatpush.msra.mxu0 0.0
    %1004 = vmatpush.msra.mxu0 0.0
    %1005 = vmatpush.msra.mxu0 0.0
    %1006 = vmatpush.msra.mxu0 0.0
    %1007 = vmatpush.msra.mxu0 0.0
    %1008 = vmatpush.msra.mxu0 0.0
    %1009 = vmatpush.msra.mxu0 0.0
    %1010 = vmatpush.msra.mxu0 0.0
    %1011 = vmatpush.msra.mxu0 0.0
    %1012 = vmatpush.msra.mxu0 0.0
    %1013 = vmatpush.msra.mxu0 0.0
    %1014 = vmatpush.msra.mxu0 %v990
    %1015 = vmatpush.msra.mxu0 %v988
    %1016 = vmatmul.f32.gmra.mxu0 %v998
    %v1017 = vpop.f32.mrf.mxu0
    %v1018 = vadd.f32 %v995, %v1017
    %1019 = vdwg.mxu0
    %v1020 = vmax.f32 %v1018, 0.0
    %1021 = vrot.lane.b32.xlu0 %v815, 120
    %v1022 = vpop.permute.xlu0 %1021
    %1023 = vrot.lane.b32.xlu0 %v816, 120
    %v1024 = vpop.permute.xlu0 %1023
    %1025 = vrot.lane.b32.xlu0 %v815, 104
    %v1026 = vpop.permute.xlu0 %1025
    %1027 = vrot.lane.b32.xlu0 %v816, 104
    %v1028 = vpop.permute.xlu0 %1027
    %v1029 = vld [vmem:[#allocation5 + $0x22] sm:$0x1]
    %v1030 = vperm.slane %v1029, 0
    %1031 = vrot.lane.b32.xlu0 %v815, 48
    %v1032 = vpop.permute.xlu0 %1031
    %1033 = vrot.lane.b32.xlu0 %v816, 48
    %v1034 = vpop.permute.xlu0 %1033
    %1035 = vrot.lane.b32.xlu0 %v1022, 48
    %v1036 = vpop.permute.xlu0 %1035
    %1037 = vrot.lane.b32.xlu0 %v1024, 48
    %v1038 = vpop.permute.xlu0 %1037
    %1039 = vrot.lane.b32.xlu0 %v820, 48
    %v1040 = vpop.permute.xlu0 %1039
    %1041 = vrot.lane.b32.xlu0 %v822, 48
    %v1042 = vpop.permute.xlu0 %1041
    %1043 = vrot.lane.b32.xlu0 %v1026, 48
    %v1044 = vpop.permute.xlu0 %1043
    %1045 = vrot.lane.b32.xlu0 %v1028, 48
    %v1046 = vpop.permute.xlu0 %1045
    %vm1055 = vcmask 523264
    %v1057 = vsel %vm1055, %v1020, 0
    %1059 = vmatpush.msra.mxu0 0.0
    %1060 = vmatpush.msra.mxu0 0.0
    %1061 = vmatpush.msra.mxu0 0.0
    %1062 = vmatpush.msra.mxu0 0.0
    %1063 = vmatpush.msra.mxu0 0.0
    %1064 = vmatpush.msra.mxu0 0.0
    %1065 = vmatpush.msra.mxu0 0.0
    %1066 = vmatpush.msra.mxu0 0.0
    %1067 = vmatpush.msra.mxu0 %v1046
    %1068 = vmatpush.msra.mxu0 %v1044
    %1069 = vmatpush.msra.mxu0 %v1042
    %1070 = vmatpush.msra.mxu0 %v1040
    %1071 = vmatpush.msra.mxu0 %v1038
    %1072 = vmatpush.msra.mxu0 %v1036
    %1073 = vmatpush.msra.mxu0 %v1034
    %1074 = vmatpush.msra.mxu0 %v1032
    %1075 = vmatmul.f32.gmra.mxu0 %v1057
    %v1076 = vpop.f32.mrf.mxu0
    %v1077 = vadd.f32 %v1030, %v1076
    %1078 = vdwg.mxu0
    %v1079 = vsel %vm303, %v1077, 0.0
    %1080 = vst [vmem:[#allocation7] sm:$0xff] %v1079
    // Predicated region
    $region18: #{tpu_custom_call.1} parent=1 // pred_check
      _
    $region19: #{tpu_custom_call.1} parent=1 // pred_check_branch
      %1082 = sbr.rel (0) target = $region21
    $region20: #{tpu_custom_call.1} parent=1 // pred_region
      %1084 = vsyncadd [#allocation4], 0
      %s1086 = sshll.u32 [#allocation7], 4
      %s1087 = int_to_ptr.vmem [resolvable:$true] %s1086
      %s1088 = sshll.u32 %s2, 4
      %s1089 = int_to_ptr.hbm [resolvable:$true] %s1088
      %1091 = dma.vmem_to_hbm [thread:$0]  %s1087, 128, %s1089, [#allocation4]
    $region21: #{tpu_custom_call.1} parent=1 // pred_fallthru
      _
    // Predicated region
    $region22: #{tpu_custom_call.1} parent=1 // pred_check
      _
    $region23: #{tpu_custom_call.1} parent=1 // pred_check_branch
      %1093 = sbr.rel (0) target = $region25
    $region24: #{tpu_custom_call.1} parent=1 // pred_region
      %1095 = dma.done [#allocation4], 128
    $region25: #{tpu_custom_call.1} parent=1 // pred_fallthru
      _
    %1096 = vsyncpa [#allocation3], 1
    %1097 = vsyncpa [#allocation6], 1
    %1098 = vsyncpa [#allocation4], 1

</llo_original>
